<compile_context>
chip_gen: v5e
topology: v5e:2x2
jax: 0.10.0
libtpu: 0.0.40
codegen_flags: <defaults>
</compile_context>

<pallas_src>
import functools

import jax
import jax.numpy as jnp
from jax import lax
from jax.experimental import pallas as pl
from jax.experimental.pallas import tpu as pltpu

_VMEM_LIMIT = 32 * 1024 * 1024          # safe scoped-VMEM budget on v5e / v6e / v7x
_FAST_PATH_BYTES = 4 * 1024 * 1024      # single-kernel path if f32(x) fits in this
_TARGET_BLOCK_BYTES = 2 * 1024 * 1024   # ~2 MiB x blocks amortize per-step overhead


def _conv_sum(get_chan, w_ref, num_chan):
    """1x1 conv (no bias): weighted sum over channels, unrolled scalar-broadcast FMAs."""
    y = get_chan(0) * w_ref[0]
    for c in range(1, num_chan):
        y = y + get_chan(c) * w_ref[c]
    return y


def _fused_kernel(w_ref, gamma_ref, beta_ref, x_ref, o_ref, *, inv_m, eps):
    """Small-problem fast path: conv -> batch stats -> normalize in one VMEM sweep."""
    C = x_ref.shape[1]
    y = _conv_sum(lambda c: x_ref[:, c, :, :].astype(jnp.float32), w_ref, C)  # (N,R,128)
    # NOTE: E[y^2]-E[y]^2 in f32 can cancel for |mean| >> std at very large M; clamped
    # at 0 and acceptable for this forward pass.
    s1 = jnp.sum(y, keepdims=True)                      # (1,1,1) cross-lane reduce (XLU)
    s2 = jnp.sum(y * y, keepdims=True)
    mean = s1 * inv_m
    var = jnp.maximum(s2 * inv_m - mean * mean, 0.0)    # biased batch variance
    inv_std = lax.rsqrt(var + eps)                      # EUP
    scale = inv_std * gamma_ref[0]
    shift = beta_ref[0] - mean * scale
    o_ref[...] = (y * scale + shift).astype(o_ref.dtype)


def _stats_kernel(w_ref, gamma_ref, beta_ref, x_ref, y_ref, scale_ref, shift_ref,
                  acc_sum, acc_sq, *, inv_m, eps):
    """Pass 1: conv output y (written to HBM) + global sum / sum-of-squares -> scale,shift."""
    n, t = pl.program_id(0), pl.program_id(1)

    @pl.when(jnp.logical_and(n == 0, t == 0))
    def _():
        acc_sum[...] = jnp.zeros_like(acc_sum)
        acc_sq[...] = jnp.zeros_like(acc_sq)

    C = x_ref.shape[1]
    y = _conv_sum(lambda c: x_ref[0, c, :, :].astype(jnp.float32), w_ref, C)  # (R,128)
    y_ref[0] = y                           # dense (R,128) store of the conv output
    acc_sum[...] += y                      # per-position partial sums (no per-tile XLU)
    acc_sq[...] += y * y

    @pl.when(jnp.logical_and(n == pl.num_programs(0) - 1,
                             t == pl.num_programs(1) - 1))
    def _():
        s1 = jnp.sum(acc_sum[...], keepdims=True)       # (1,1) cross-lane reduce (XLU)
        s2 = jnp.sum(acc_sq[...], keepdims=True)
        mean = s1 * inv_m
        var = jnp.maximum(s2 * inv_m - mean * mean, 0.0)  # biased batch variance
        inv_std = lax.rsqrt(var + eps)
        scale = inv_std * gamma_ref[0]
        shift = beta_ref[0] - mean * scale
        scale_ref[...] = scale
        shift_ref[...] = shift


def _apply_kernel(scale_ref, shift_ref, y_ref, o_ref):
    """Pass 2: y*scale + shift on dense (R,128) blocks (one FMA per vreg)."""
    o_ref[...] = (y_ref[...] * scale_ref[0, 0] + shift_ref[0, 0]).astype(o_ref.dtype)


def _choose_r_tile(r_total, c, target_bytes=_TARGET_BLOCK_BYTES):
    """Pick tile row count (rows of 128 lanes): ~target_bytes per x block, multiple of 8
    sublanes (or the full extent). Returns (r_tile, padded_r_total)."""
    bytes_per_row = c * 128 * 4
    r_max = max(8, (target_bytes // bytes_per_row) // 8 * 8)
    if r_total <= r_max:
        return r_total, r_total            # single tile along rows (full-dim block ok)
    r = r_max
    while r >= max(8, r_max // 2):         # prefer a clean divisor near the target size
        if r_total % r == 0:
            return r, r_total
        r -= 8
    r = r_max                              # otherwise pad rows up to a tile multiple
    return r, ((r_total + r - 1) // r) * r


def simple_fcn_forward(x_nchw, conv_weight, gamma, beta, eps=1e-5, *,
                       force_two_pass=False):
    """x_nchw: (N, C, H, W). conv_weight: (1, C, 1, 1). gamma/beta: (1,).
    Returns (N, 1, H, W) float32 (Conv2d 1x1 no-bias -> BatchNorm2d train-mode)."""
    N, C, H, W = x_nchw.shape
    HW = H * W
    M = N * HW                              # real element count per BN channel

    r_total_raw = -(-HW // 128)             # ceil(HW / 128)
    r_tile, r_total = _choose_r_tile(r_total_raw, C)
    hw_pad = r_total * 128

    # Lane/sublane-dense layout; keep the input dtype (cast in-register inside kernels).
    x3 = x_nchw.reshape(N, C, HW)
    if hw_pad != HW:
        x3 = jnp.pad(x3, ((0, 0), (0, 0), (0, hw_pad - HW)))
    x4 = x3.reshape(N, C, r_total, 128)

    w = conv_weight.reshape(C).astype(jnp.float32)
    g = gamma.reshape(1).astype(jnp.float32)
    b = beta.reshape(1).astype(jnp.float32)

    smem = pl.BlockSpec(memory_space=pltpu.MemorySpace.SMEM)
    vmem = pl.BlockSpec(memory_space=pltpu.MemorySpace.VMEM)

    x_f32_bytes = N * C * r_total * 128 * 4

    if (not force_two_pass) and x_f32_bytes <= _FAST_PATH_BYTES:
        # Single grid-free kernel: load x once, stats + normalize in one body.
        out3 = pl.pallas_call(
            functools.partial(_fused_kernel, inv_m=1.0 / M, eps=float(eps)),
            out_shape=jax.ShapeDtypeStruct((N, r_total, 128), jnp.float32),
            in_specs=[smem, smem, smem, vmem],
            out_specs=vmem,
            compiler_params=pltpu.CompilerParams(vmem_limit_bytes=_VMEM_LIMIT),
        )(w, g, b, x4)
    else:
        T = r_total // r_tile

        # Pass 1: conv output y + global statistics -> (scale, shift).
        y, scale, shift = pl.pallas_call(
            functools.partial(_stats_kernel, inv_m=1.0 / M, eps=float(eps)),
            out_shape=(jax.ShapeDtypeStruct((N, r_total, 128), jnp.float32),
                       jax.ShapeDtypeStruct((1, 1), jnp.float32),
                       jax.ShapeDtypeStruct((1, 1), jnp.float32)),
            grid=(N, T),
            in_specs=[smem, smem, smem,
                      pl.BlockSpec((1, C, r_tile, 128), lambda n, t: (n, 0, t, 0))],
            out_specs=(pl.BlockSpec((1, r_tile, 128), lambda n, t: (n, t, 0)),
                       pl.BlockSpec((1, 1), lambda n, t: (0, 0)),
                       pl.BlockSpec((1, 1), lambda n, t: (0, 0))),
            scratch_shapes=[pltpu.VMEM((r_tile, 128), jnp.float32),
                            pltpu.VMEM((r_tile, 128), jnp.float32)],
            compiler_params=pltpu.CompilerParams(
                dimension_semantics=("arbitrary", "arbitrary"),
                vmem_limit_bytes=_VMEM_LIMIT),
        )(w, g, b, x4)

        # Pass 2: stream y (C-times smaller than x), apply affine normalization.
        out3 = pl.pallas_call(
            _apply_kernel,
            out_shape=jax.ShapeDtypeStruct((N, r_total, 128), jnp.float32),
            grid=(N, T),
            in_specs=[smem, smem,
                      pl.BlockSpec((1, r_tile, 128), lambda n, t: (n, t, 0))],
            out_specs=pl.BlockSpec((1, r_tile, 128), lambda n, t: (n, t, 0)),
            compiler_params=pltpu.CompilerParams(
                dimension_semantics=("parallel", "parallel"),
                vmem_limit_bytes=_VMEM_LIMIT),
        )(scale, shift, y)

    out = out3.reshape(N, hw_pad)
    if hw_pad != HW:
        out = out[:, :HW]
    return out.reshape(N, 1, H, W)


if __name__ == "__main__":
    key = jax.random.PRNGKey(0)
    k_x, k_w = jax.random.split(key)

    N, C, H, W = 2, 4, 16, 16   # input_dim = 4

    x = jax.random.normal(k_x, (N, C, H, W), dtype=jnp.float32)

    # Deterministic params (shapes from nn.Conv2d(C, 1, 1, bias=False) + nn.BatchNorm2d(1)).
    bound = 1.0 / (C ** 0.5)
    conv_weight = jax.random.uniform(k_w, (1, C, 1, 1), dtype=jnp.float32,
                                     minval=-bound, maxval=bound)
    bn_gamma = jnp.ones((1,), dtype=jnp.float32)   # BatchNorm2d default weight
    bn_beta = jnp.zeros((1,), dtype=jnp.float32)   # BatchNorm2d default bias

    # Pure-JAX reference: 1x1 conv (no bias) -> BatchNorm2d train-mode batch stats.
    y_ref = jnp.einsum("nchw,c->nhw", x, conv_weight.reshape(C))[:, None, :, :]
    mean = y_ref.mean()
    var = ((y_ref - mean) ** 2).mean()
    ref = (y_ref - mean) / jnp.sqrt(var + 1e-5) * bn_gamma[0] + bn_beta[0]

    # Fast path (single fused kernel).
    out_fast = jax.block_until_ready(
        simple_fcn_forward(x, conv_weight, bn_gamma, bn_beta))
    assert out_fast.shape == (N, 1, H, W), out_fast.shape
    assert jnp.allclose(out_fast, ref, atol=1e-4, rtol=1e-4), \
        float(jnp.max(jnp.abs(out_fast - ref)))

    # Tiled two-pass path (exercised explicitly at small shape for coverage).
    out_tiled = jax.block_until_ready(
        simple_fcn_forward(x, conv_weight, bn_gamma, bn_beta, force_two_pass=True))
    assert out_tiled.shape == (N, 1, H, W), out_tiled.shape
    assert jnp.allclose(out_tiled, ref, atol=1e-4, rtol=1e-4), \
        float(jnp.max(jnp.abs(out_tiled - ref)))

    print("KERNEL_OK")
</pallas_src>

<mosaic_0001>
module attributes {stable_mosaic.version = 11 : i64} {
  func.func @_fused_kernel(%arg0: memref<4xf32, #tpu.memory_space<smem>>, %arg1: memref<1xf32, #tpu.memory_space<smem>>, %arg2: memref<1xf32, #tpu.memory_space<smem>>, %arg3: memref<2x4x2x128xf32, #tpu.memory_space<vmem>>, %arg4: memref<2x2x128xf32, #tpu.memory_space<vmem>>) attributes {dimension_semantics = [], scalar_prefetch = 0 : i64, scratch_operands = 0 : i64, tpu.core_type = #tpu.core_type<tc>} {
    %c0 = arith.constant 0 : index
    %c0_0 = arith.constant 0 : index
    %c0_1 = arith.constant 0 : index
    %c0_2 = arith.constant 0 : index
    %0 = vector.load %arg3[%c0, %c0_0, %c0_1, %c0_2] : memref<2x4x2x128xf32, #tpu.memory_space<vmem>>, vector<2x1x2x128xf32>
    %1 = vector.shape_cast %0 : vector<2x1x2x128xf32> to vector<2x2x128xf32>
    %c0_3 = arith.constant 0 : index
    %2 = memref.load %arg0[%c0_3] : memref<4xf32, #tpu.memory_space<smem>>
    %3 = vector.broadcast %2 : f32 to vector<2x2x128xf32>
    %4 = arith.mulf %1, %3 : vector<2x2x128xf32>
    %c0_4 = arith.constant 0 : index
    %c1 = arith.constant 1 : index
    %c0_5 = arith.constant 0 : index
    %c0_6 = arith.constant 0 : index
    %5 = vector.load %arg3[%c0_4, %c1, %c0_5, %c0_6] : memref<2x4x2x128xf32, #tpu.memory_space<vmem>>, vector<2x1x2x128xf32>
    %6 = vector.shape_cast %5 : vector<2x1x2x128xf32> to vector<2x2x128xf32>
    %c1_7 = arith.constant 1 : index
    %7 = memref.load %arg0[%c1_7] : memref<4xf32, #tpu.memory_space<smem>>
    %8 = vector.broadcast %7 : f32 to vector<2x2x128xf32>
    %9 = arith.mulf %6, %8 : vector<2x2x128xf32>
    %10 = arith.addf %4, %9 : vector<2x2x128xf32>
    %c0_8 = arith.constant 0 : index
    %c2 = arith.constant 2 : index
    %c0_9 = arith.constant 0 : index
    %c0_10 = arith.constant 0 : index
    %11 = vector.load %arg3[%c0_8, %c2, %c0_9, %c0_10] : memref<2x4x2x128xf32, #tpu.memory_space<vmem>>, vector<2x1x2x128xf32>
    %12 = vector.shape_cast %11 : vector<2x1x2x128xf32> to vector<2x2x128xf32>
    %c2_11 = arith.constant 2 : index
    %13 = memref.load %arg0[%c2_11] : memref<4xf32, #tpu.memory_space<smem>>
    %14 = vector.broadcast %13 : f32 to vector<2x2x128xf32>
    %15 = arith.mulf %12, %14 : vector<2x2x128xf32>
    %16 = arith.addf %10, %15 : vector<2x2x128xf32>
    %c0_12 = arith.constant 0 : index
    %c3 = arith.constant 3 : index
    %c0_13 = arith.constant 0 : index
    %c0_14 = arith.constant 0 : index
    %17 = vector.load %arg3[%c0_12, %c3, %c0_13, %c0_14] : memref<2x4x2x128xf32, #tpu.memory_space<vmem>>, vector<2x1x2x128xf32>
    %18 = vector.shape_cast %17 : vector<2x1x2x128xf32> to vector<2x2x128xf32>
    %c3_15 = arith.constant 3 : index
    %19 = memref.load %arg0[%c3_15] : memref<4xf32, #tpu.memory_space<smem>>
    %20 = vector.broadcast %19 : f32 to vector<2x2x128xf32>
    %21 = arith.mulf %18, %20 : vector<2x2x128xf32>
    %22 = arith.addf %16, %21 : vector<2x2x128xf32>
    %23 = vector.shape_cast %22 : vector<2x2x128xf32> to vector<1x2x2x128xf32>
    %cst = arith.constant dense<0.000000e+00> : vector<1xf32>
    %24 = vector.multi_reduction <add>, %23, %cst [1, 2, 3] : vector<1x2x2x128xf32> to vector<1xf32>
    %25 = vector.shape_cast %24 : vector<1xf32> to vector<1x1x1x1xf32>
    %26 = vector.extract %25[0, 0, 0, 0] : f32 from vector<1x1x1x1xf32>
    %27 = vector.broadcast %26 : f32 to vector<1x1x1xf32>
    %28 = arith.mulf %22, %22 : vector<2x2x128xf32>
    %29 = vector.shape_cast %28 : vector<2x2x128xf32> to vector<1x2x2x128xf32>
    %cst_16 = arith.constant dense<0.000000e+00> : vector<1xf32>
    %30 = vector.multi_reduction <add>, %29, %cst_16 [1, 2, 3] : vector<1x2x2x128xf32> to vector<1xf32>
    %31 = vector.shape_cast %30 : vector<1xf32> to vector<1x1x1x1xf32>
    %32 = vector.extract %31[0, 0, 0, 0] : f32 from vector<1x1x1x1xf32>
    %33 = vector.broadcast %32 : f32 to vector<1x1x1xf32>
    %cst_17 = arith.constant 0.001953125 : f32
    %34 = vector.broadcast %cst_17 : f32 to vector<1x1x1xf32>
    %35 = arith.mulf %27, %34 : vector<1x1x1xf32>
    %cst_18 = arith.constant 0.001953125 : f32
    %36 = vector.broadcast %cst_18 : f32 to vector<1x1x1xf32>
    %37 = arith.mulf %33, %36 : vector<1x1x1xf32>
    %38 = arith.mulf %35, %35 : vector<1x1x1xf32>
    %39 = arith.subf %37, %38 : vector<1x1x1xf32>
    %cst_19 = arith.constant 0.000000e+00 : f32
    %40 = vector.broadcast %cst_19 : f32 to vector<1x1x1xf32>
    %41 = arith.maximumf %39, %40 : vector<1x1x1xf32>
    %cst_20 = arith.constant 9.99999974E-6 : f32
    %42 = vector.broadcast %cst_20 : f32 to vector<1x1x1xf32>
    %43 = arith.addf %41, %42 : vector<1x1x1xf32>
    %44 = math.rsqrt %43 : vector<1x1x1xf32>
    %c0_21 = arith.constant 0 : index
    %45 = memref.load %arg1[%c0_21] : memref<1xf32, #tpu.memory_space<smem>>
    %46 = vector.broadcast %45 : f32 to vector<1x1x1xf32>
    %47 = arith.mulf %44, %46 : vector<1x1x1xf32>
    %c0_22 = arith.constant 0 : index
    %48 = memref.load %arg2[%c0_22] : memref<1xf32, #tpu.memory_space<smem>>
    %49 = arith.mulf %35, %47 : vector<1x1x1xf32>
    %50 = vector.broadcast %48 : f32 to vector<1x1x1xf32>
    %51 = arith.subf %50, %49 : vector<1x1x1xf32>
    %52 = vector.broadcast %47 : vector<1x1x1xf32> to vector<2x2x128xf32>
    %53 = arith.mulf %22, %52 : vector<2x2x128xf32>
    %54 = vector.broadcast %51 : vector<1x1x1xf32> to vector<2x2x128xf32>
    %55 = arith.addf %53, %54 : vector<2x2x128xf32>
    %c0_23 = arith.constant 0 : index
    %c0_24 = arith.constant 0 : index
    %c0_25 = arith.constant 0 : index
    %56 = vector.load %arg4[%c0_23, %c0_24, %c0_25] : memref<2x2x128xf32, #tpu.memory_space<vmem>>, vector<2x2x128xf32>
    tpu.vector_store %arg4[%c0_23, %c0_24, %c0_25], %55 {strides = array<i32>} : memref<2x2x128xf32, #tpu.memory_space<vmem>>, vector<2x2x128xf32>,
    return
  }
}

</mosaic_0001>

<llo_original>
// kernel: tpu_custom_call.1
$region0: #{tpu_custom_call.1}
  #allocation0 [shape = 'u32[]', space=smem, size = 0x4, offset = 0x4, fixed_abs, tag = 'smem constant byte address 0x4 - core index']
  #allocation1 [shape = 'u32[72,128]{1,0:T(1,128)}', space=vmem, size = 0x9000, scoped, tag = 'internal scratch']
  #allocation2 [shape = 'f32[1]{0:T(128)S(6)}', space=smem, size = 0x200, scoped, tag = 'scoped memory for tpu_custom_call.1']
  #allocation3 [shape = 'f32[1]{0:T(128)S(6)}', space=smem, size = 0x200, scoped, tag = 'scoped memory for tpu_custom_call.1']
  %s0 = inlined_call_operand.vmem [shape: f32[4], index: 0, kind: input, shape index: {}]
  %s1 = inlined_call_operand.<no memory space> [shape: f32[1], index: 1, kind: input, shape index: {}]
  %s2 = inlined_call_operand.<no memory space> [shape: f32[1], index: 2, kind: input, shape index: {}]
  %s3 = inlined_call_operand.hbm [shape: f32[2,4,2,128], index: 3, kind: input, shape index: {}]
  %s4 = inlined_call_operand.hbm [shape: f32[2,2,128], index: 4, kind: output, shape index: {}]
  %s5 = sld [smem:[#allocation0]]
  $region34: #{tpu_custom_call.1} parent=0
    _
  %s7 = ssub.s32 1, %s5
  %s8 = scalar_select 0, %s7, %s5
  %9 = sst [smem:[#allocation2]] %s1
  %10 = sst [smem:[#allocation3]] %s2
  $region1: #{tpu_custom_call.1} parent=0
    #allocation4 [shape = 'u8[512]{0}', space=smem, size = 0x200, scoped, tag = 'input window, operand 0, single buffered']
    #allocation5 [shape = 's32[1]{0}', space=sflag, size = 0x4, scoped, tag = 'scoped memory for tpu_custom_call.1']
    #allocation6 [shape = 's32[1]{0}', space=sflag, size = 0x4, scoped, tag = 'scoped memory for tpu_custom_call.1']
    #allocation7 [shape = 's32[1]{0}', space=sflag, size = 0x4, scoped, tag = 'scoped memory for tpu_custom_call.1']
    #allocation8 [shape = 'u8[8192]{0}', space=vmem, size = 0x2000, scoped, tag = 'input window, operand 3, single buffered']
    #allocation9 [shape = 'u8[2048]{0}', space=vmem, size = 0x800, scoped, tag = 'output window, operand 0, single buffered']
    %11 = vsyncpa [#allocation7], 0
    %12 = vsyncpa [#allocation5], 0
    %13 = vsyncpa [#allocation6], 0
    // Predicated region
    $region2: #{tpu_custom_call.1} parent=1 // pred_check
      _
    $region3: #{tpu_custom_call.1} parent=1 // pred_check_branch
      %15 = sbr.rel (0) target = $region5
    $region4: #{tpu_custom_call.1} parent=1 // pred_region
      %17 = vsyncadd [#allocation7], 0
      %s19 = sshll.u32 %s0, 4
      %s20 = int_to_ptr.vmem [resolvable:$true] %s19
      %22 = dma.vmem_to_smem %s20, 16, [#allocation4], [#allocation7]
    $region5: #{tpu_custom_call.1} parent=1 // pred_fallthru
      _
    // Predicated region
    $region6: #{tpu_custom_call.1} parent=1 // pred_check
      _
    $region7: #{tpu_custom_call.1} parent=1 // pred_check_branch
      %24 = sbr.rel (0) target = $region9
    $region8: #{tpu_custom_call.1} parent=1 // pred_region
      _
    $region9: #{tpu_custom_call.1} parent=1 // pred_fallthru
      _
    // Predicated region
    $region10: #{tpu_custom_call.1} parent=1 // pred_check
      _
    $region11: #{tpu_custom_call.1} parent=1 // pred_check_branch
      %26 = sbr.rel (0) target = $region13
    $region12: #{tpu_custom_call.1} parent=1 // pred_region
      _
    $region13: #{tpu_custom_call.1} parent=1 // pred_fallthru
      _
    // Predicated region
    $region14: #{tpu_custom_call.1} parent=1 // pred_check
      _
    $region15: #{tpu_custom_call.1} parent=1 // pred_check_branch
      %28 = sbr.rel (0) target = $region17
    $region16: #{tpu_custom_call.1} parent=1 // pred_region
      %30 = vsyncadd [#allocation5], 0
      %s31 = sshll.u32 %s3, 4
      %s32 = int_to_ptr.hbm [resolvable:$true] %s31
      %s33 = sshll.u32 [#allocation8], 4
      %s34 = int_to_ptr.vmem [resolvable:$true] %s33
      %39 = dma.hbm_to_vmem [thread:$0]  %s32, 256, %s34, [#allocation5], 32, 32, 2
    $region17: #{tpu_custom_call.1} parent=1 // pred_fallthru
      _
    // Predicated region
    $region18: #{tpu_custom_call.1} parent=1 // pred_check
      _
    $region19: #{tpu_custom_call.1} parent=1 // pred_check_branch
      %41 = sbr.rel (0) target = $region21
    $region20: #{tpu_custom_call.1} parent=1 // pred_region
      %43 = dma.done [#allocation7], 16
    $region21: #{tpu_custom_call.1} parent=1 // pred_fallthru
      _
    // Predicated region
    $region22: #{tpu_custom_call.1} parent=1 // pred_check
      _
    $region23: #{tpu_custom_call.1} parent=1 // pred_check_branch
      %45 = sbr.rel (0) target = $region25
    $region24: #{tpu_custom_call.1} parent=1 // pred_region
      %47 = dma.done [#allocation5], 256
    $region25: #{tpu_custom_call.1} parent=1 // pred_fallthru
      _
    %48 = sfence
    %v49 = vld [vmem:[#allocation8] sm:$0x3]
    %v50 = vld [vmem:[#allocation8 + $0x8] sm:$0x3]
    %s51 = sld [smem:[#allocation4]]
    %v52 = vstv %s51
    %v53 = vmul.f32 %v49, %v52
    %v54 = vmul.f32 %v50, %v52
    %s55 = scalar_lea.vmem [#allocation8], 2
    %v56 = vld [vmem:[%s55] sm:$0x3]
    %v57 = vld [vmem:[%s55 + $0x8] sm:$0x3]
    %s58 = sld [smem:[#allocation4 + $0x1]]
    %v59 = vstv %s58
    %v60 = vmul.f32 %v56, %v59
    %v61 = vmul.f32 %v57, %v59
    %v62 = vadd.f32 %v53, %v60
    %v63 = vadd.f32 %v54, %v61
    %s64 = scalar_lea.vmem [#allocation8], 4
    %v65 = vld [vmem:[%s64] sm:$0x3]
    %v66 = vld [vmem:[%s64 + $0x8] sm:$0x3]
    %s67 = sld [smem:[#allocation4 + $0x2]]
    %v68 = vstv %s67
    %v69 = vmul.f32 %v65, %v68
    %v70 = vmul.f32 %v66, %v68
    %v71 = vadd.f32 %v62, %v69
    %v72 = vadd.f32 %v63, %v70
    %s73 = scalar_lea.vmem [#allocation8], 6
    %v74 = vld [vmem:[%s73] sm:$0x3]
    %v75 = vld [vmem:[%s73 + $0x8] sm:$0x3]
    %s76 = sld [smem:[#allocation4 + $0x3]]
    %v77 = vstv %s76
    %v78 = vmul.f32 %v74, %v77
    %v79 = vmul.f32 %v75, %v77
    %v80 = vadd.f32 %v71, %v78
    %v81 = vadd.f32 %v72, %v79
    %vm82 = vcmask 1041408
    %v83 = vsel %vm82, %v80, 0.0
    %v84 = vsel %vm82, %v81, 0.0
    %v85 = vadd.f32 %v83, %v84
    %86 = vadd.xlane.f32.xlu0 %v85
    %v87 = vpop.xlane.xlu0 %86
    %v88 = vrot.slane %v87, 4
    %v89 = vadd.f32 %v87, %v88
    %v90 = vrot.slane %v89, 2
    %v91 = vadd.f32 %v89, %v90
    %v92 = vrot.slane %v91, 1
    %v93 = vadd.f32 %v91, %v92
    %s94 = vtos %v93
    %v95 = vstv %s94
    %v96 = vmul.f32 %v80, %v80
    %v97 = vmul.f32 %v81, %v81
    %v98 = vsel %vm82, %v96, 0.0
    %v99 = vsel %vm82, %v97, 0.0
    %v100 = vadd.f32 %v98, %v99
    %101 = vadd.xlane.f32.xlu0 %v100
    %v102 = vpop.xlane.xlu0 %101
    %v103 = vrot.slane %v102, 4
    %v104 = vadd.f32 %v102, %v103
    %v105 = vrot.slane %v104, 2
    %v106 = vadd.f32 %v104, %v105
    %v107 = vrot.slane %v106, 1
    %v108 = vadd.f32 %v106, %v107
    %s109 = vtos %v108
    %v110 = vstv %s109
    %v111 = vmul.f32 %v95, 0.001953125
    %v112 = vmul.f32 %v110, 0.001953125
    %v113 = vmul.f32 %v111, %v111
    %v114 = vsub.f32 %v112, %v113
    %v115 = vmax.f32 %v114, 0.0
    %v116 = vadd.f32 %v115, 1e-05
    %v117 = vrsqrt.pop %v116
    %v118 = vmul.f32 %v117, %v116
    %v119 = vmul.f32 %v118, %v117
    %v120 = vmul.f32 0.5, %v119
    %v121 = vsub.f32 1.5, %v120
    %v122 = vmul.f32 %v117, %v121
    %vm123 = vweird.f32 %v116
    %vm124 = vweird.f32 %v117
    %vm125 = vmor %vm123, %vm124
    %v126 = vsel %vm125, %v117, %v122
    %s127 = sld [smem:[#allocation2]]
    %v128 = vstv %s127
    %v129 = vmul.f32 %v126, %v128
    %s130 = sld [smem:[#allocation3]]
    %v131 = vmul.f32 %v111, %v129
    %v132 = vstv %s130
    %v133 = vsub.f32 %v132, %v131
    %v134 = vmul.f32 %v80, %v129
    %v135 = vmul.f32 %v81, %v129
    %v136 = vadd.f32 %v134, %v133
    %v137 = vadd.f32 %v135, %v133
    %138 = vst [vmem:[#allocation9] sm:$0x3] %v136
    %139 = vst [vmem:[#allocation9 + $0x2] sm:$0x3] %v137
    // Predicated region
    $region26: #{tpu_custom_call.1} parent=1 // pred_check
      _
    $region27: #{tpu_custom_call.1} parent=1 // pred_check_branch
      %141 = sbr.rel (0) target = $region29
    $region28: #{tpu_custom_call.1} parent=1 // pred_region
      %143 = vsyncadd [#allocation6], 0
      %s144 = sshll.u32 [#allocation9], 4
      %s145 = int_to_ptr.vmem [resolvable:$true] %s144
      %s146 = sshll.u32 %s4, 4
      %s147 = int_to_ptr.hbm [resolvable:$true] %s146
      %152 = dma.vmem_to_hbm [thread:$0]  %s145, 64, %s147, [#allocation6], 32, 32, 2
    $region29: #{tpu_custom_call.1} parent=1 // pred_fallthru
      _
    // Predicated region
    $region30: #{tpu_custom_call.1} parent=1 // pred_check
      _
    $region31: #{tpu_custom_call.1} parent=1 // pred_check_branch
      %154 = sbr.rel (0) target = $region33
    $region32: #{tpu_custom_call.1} parent=1 // pred_region
      %156 = dma.done [#allocation6], 64
    $region33: #{tpu_custom_call.1} parent=1 // pred_fallthru
      _
    %157 = vsyncpa [#allocation5], 1
    %158 = vsyncpa [#allocation6], 1
    %159 = vsyncpa [#allocation7], 1

</llo_original>
